<compile_context>
chip_gen: v7x
topology: tpu7x:2x2x1
jax: 0.10.0
libtpu: 0.0.40
codegen_flags: <defaults>
</compile_context>

<pallas_src>
import jax
import jax.numpy as jnp
from jax.experimental import pallas as pl
from jax.experimental.pallas import tpu as pltpu


_BLOCK_BUDGET = 6 * 1024 * 1024   # padded VMEM bytes per block (x tile + bias col)
_VMEM_LIMIT = 40 * 1024 * 1024    # >= 4 * block + slack; < v7x's 64 MiB/TC physical


def _round_up(x: int, m: int) -> int:
    return ((x + m - 1) // m) * m


def _add_bias_kernel(x_ref, b_ref, o_ref):
    # x_ref: (r_tile, l_tile); b_ref: (r_tile, 1) per-row bias column.
    # Lane-broadcast add runs on the VPU; free filler while DMA-bound.
    o_ref[...] = x_ref[...] + b_ref[...]


def _choose_tiles(R: int, L: int, itemsize: int):
    """Pick (r_tile, l_tile) for the flattened (R, L) = (N*C, L) view.

    Budget is checked on padded VMEM bytes: sublanes round up to the packing
    factor, lanes round up to 128, and the bias column costs one extra padded
    lane-group (128 lanes) per row.
    """
    pack = max(8, 32 // itemsize)          # 8 f32, 16 bf16, 32 int8
    lpad_L = _round_up(L, 128)

    def cost(r, l):
        return _round_up(r, pack) * (_round_up(l, 128) + 128) * itemsize

    if cost(pack, L) <= _BLOCK_BUDGET:
        # Full-L, fully contiguous row blocks; grow rows to fill the budget.
        l_tile = L
        r_tile = (_BLOCK_BUDGET // ((lpad_L + 128) * itemsize)) // pack * pack
        r_tile = max(pack, r_tile)
        if r_tile >= R:
            r_tile = R                      # full extent (always legal)
    else:
        # Single row-group is already huge: split L into big 128-multiples.
        r_tile = min(R, pack)
        per_row = _round_up(r_tile, pack) * itemsize
        l_tile = (_BLOCK_BUDGET // per_row - 128) // 128 * 128
        l_tile = max(128, l_tile)

    # Expose >=2 "parallel" grid steps when the data allows, so both v7x
    # TensorCores (each with its own DMA path) get work.
    steps = pl.cdiv(R, r_tile) * pl.cdiv(L, l_tile)
    if steps < 2:
        if R > pack:
            r_tile = _round_up(pl.cdiv(R, 2), pack)
        elif l_tile == L and L > 256:
            l_tile = _round_up(pl.cdiv(L, 2), 128)

    return r_tile, l_tile


def add_bias(x: jax.Array, bias: jax.Array, *, donate_x: bool = False) -> jax.Array:
    """x: (N, C, L), bias: (1, C, 1) -> (N, C, L), computing x + bias."""
    N, C, L = x.shape
    assert bias.shape == (1, C, 1)

    # PyTorch-style type promotion (e.g. bf16 x + f32 bias -> f32 result)
    # instead of silently downcasting the bias.
    out_dtype = jnp.result_type(x.dtype, bias.dtype)
    itemsize = jnp.dtype(out_dtype).itemsize

    R = N * C
    x2d = x.reshape(R, L).astype(out_dtype)             # free row-major view
    b_rows = (
        jnp.broadcast_to(bias.reshape(1, C), (N, C))    # tiny (N*C,) column
        .reshape(R, 1)
        .astype(out_dtype)
    )

    r_tile, l_tile = _choose_tiles(R, L, itemsize)
    grid = (pl.cdiv(R, r_tile), pl.cdiv(L, l_tile))     # remainder tiles masked

    out2d = pl.pallas_call(
        _add_bias_kernel,
        out_shape=jax.ShapeDtypeStruct((R, L), out_dtype),
        grid_spec=pltpu.PrefetchScalarGridSpec(
            num_scalar_prefetch=0,
            grid=grid,
            in_specs=[
                pl.BlockSpec((r_tile, l_tile), lambda r, l: (r, l)),
                # Bias column follows the row tile; constant across the lane
                # axis, so it is only re-DMA'd when the row block changes.
                pl.BlockSpec((r_tile, 1), lambda r, l: (r, 0)),
            ],
            out_specs=pl.BlockSpec((r_tile, l_tile), lambda r, l: (r, l)),
        ),
        compiler_params=pltpu.CompilerParams(
            dimension_semantics=("parallel", "parallel"),
            vmem_limit_bytes=_VMEM_LIMIT,
        ),
        cost_estimate=pl.CostEstimate(
            flops=R * L,
            transcendentals=0,
            bytes_accessed=(2 * R * L + R) * itemsize,
        ),
        input_output_aliases=({0: 0} if donate_x else {}),
    )(x2d, b_rows)

    return out2d.reshape(N, C, L)


if __name__ == "__main__":
    key = jax.random.PRNGKey(0)
    kx, kx2, kb2 = jax.random.split(key, 3)

    # --- Check 1: module-faithful init (bias == 0), small NCL shape. ---
    N, C, L = 2, 4, 16  # batch, n_features, sequence length
    x = jax.random.normal(kx, (N, C, L), dtype=jnp.float32)
    bias = jnp.zeros((1, C, 1), dtype=jnp.float32)  # fill_bias_zero

    out = jax.block_until_ready(add_bias(x, bias))
    assert out.shape == (N, C, L)
    assert jnp.allclose(out, x + bias), "mismatch vs reference (zero bias)"

    # --- Check 2: nonzero bias, row-split (>=2 parallel steps) path. ---
    N2, C2, L2 = 4, 8, 384
    x2 = jax.random.normal(kx2, (N2, C2, L2), dtype=jnp.float32)
    bias2 = jax.random.normal(kb2, (1, C2, 1), dtype=jnp.float32)

    out2 = jax.block_until_ready(add_bias(x2, bias2))
    assert out2.shape == (N2, C2, L2)
    assert jnp.allclose(out2, x2 + bias2), "mismatch vs reference (random bias)"

    print("KERNEL_OK")
</pallas_src>

<mosaic_0001>
module attributes {stable_mosaic.version = 11 : i64} {
  func.func @_add_bias_kernel(%arg0: i32, %arg1: i32, %arg2: memref<8x16xf32, #tpu.memory_space<vmem>>, %arg3: memref<8x1xf32, #tpu.memory_space<vmem>>, %arg4: memref<8x16xf32, #tpu.memory_space<vmem>>) attributes {dimension_semantics = [#tpu.dimension_semantics<parallel>, #tpu.dimension_semantics<parallel>], iteration_bounds = array<i64: 1, 1>, scalar_prefetch = 0 : i64, scratch_operands = 0 : i64, tpu.core_type = #tpu.core_type<tc>, window_params = [{transform_indices = @transform_0, window_bounds = array<i64: 8, 16>}, {transform_indices = @transform_1, window_bounds = array<i64: 8, 1>}, {transform_indices = @transform_2, window_bounds = array<i64: 8, 16>}]} {
    %c0 = arith.constant 0 : index
    %c0_0 = arith.constant 0 : index
    %0 = vector.load %arg2[%c0, %c0_0] : memref<8x16xf32, #tpu.memory_space<vmem>>, vector<8x16xf32>
    %c0_1 = arith.constant 0 : index
    %c0_2 = arith.constant 0 : index
    %1 = vector.load %arg3[%c0_1, %c0_2] : memref<8x1xf32, #tpu.memory_space<vmem>>, vector<8x1xf32>
    %2 = vector.broadcast %1 : vector<8x1xf32> to vector<8x16xf32>
    %3 = arith.addf %0, %2 : vector<8x16xf32>
    %c0_3 = arith.constant 0 : index
    %c0_4 = arith.constant 0 : index
    %4 = vector.load %arg4[%c0_3, %c0_4] : memref<8x16xf32, #tpu.memory_space<vmem>>, vector<8x16xf32>
    tpu.vector_store %arg4[%c0_3, %c0_4], %3 {strides = array<i32>} : memref<8x16xf32, #tpu.memory_space<vmem>>, vector<8x16xf32>,
    return
  }
  func.func @transform_0(%arg0: i32, %arg1: i32) -> (i32, i32) {
    %c0_i32 = arith.constant 0 : i32
    return %arg0, %arg1 : i32, i32
  }
  func.func @transform_1(%arg0: i32, %arg1: i32) -> (i32, i32) {
    %c0_i32 = arith.constant 0 : i32
    %c0_i32_0 = arith.constant 0 : i32
    return %arg0, %c0_i32 : i32, i32
  }
  func.func @transform_2(%arg0: i32, %arg1: i32) -> (i32, i32) {
    %c0_i32 = arith.constant 0 : i32
    return %arg0, %arg1 : i32, i32
  }
}

</mosaic_0001>

<llo_original>
// kernel: tpu_custom_call.1
$region0: #{tpu_custom_call.1}
  #allocation0 [shape = 'u32[]', space=smem, size = 0x4, offset = 0x4, fixed_abs, tag = 'smem constant byte address 0x4 - core index']
  #allocation1 [shape = 'u32[144,128]{1,0:T(1,128)}', space=vmem, size = 0x12000, scoped, tag = 'internal scratch']
  %s0 = inlined_call_operand.vmem [shape: f32[8,16], index: 0, kind: input, shape index: {}]
  %s1 = inlined_call_operand.vmem [shape: f32[8,1], index: 1, kind: input, shape index: {}]
  %s2 = inlined_call_operand.hbm [shape: f32[8,16], index: 2, kind: output, shape index: {}]
  %s3 = sld [smem:[#allocation0]]
  $region18: #{tpu_custom_call.1} parent=0
    _
  %s5 = ssub.s32 1, %s3
  %s6 = scalar_select 0, %s5, %s3
  $region1: #{tpu_custom_call.1} parent=0
    #allocation2 [shape = 'u8[4096]{0}', space=vmem, size = 0x1000, scoped, tag = 'output window, operand 0, single buffered']
    #allocation3 [shape = 's32[1]{0}', space=sflag, size = 0x4, scoped, tag = 'scoped memory for tpu_custom_call.1']
    %7 = vsyncpa [#allocation3], 0
    // Predicated region
    $region2: #{tpu_custom_call.1} parent=1 // pred_check
      _
    $region3: #{tpu_custom_call.1} parent=1 // pred_check_branch
      %9 = sbr.rel (0) target = $region5
    $region4: #{tpu_custom_call.1} parent=1 // pred_region
      _
    $region5: #{tpu_custom_call.1} parent=1 // pred_fallthru
      _
    // Predicated region
    $region6: #{tpu_custom_call.1} parent=1 // pred_check
      _
    $region7: #{tpu_custom_call.1} parent=1 // pred_check_branch
      %11 = sbr.rel (0) target = $region9
    $region8: #{tpu_custom_call.1} parent=1 // pred_region
      _
    $region9: #{tpu_custom_call.1} parent=1 // pred_fallthru
      _
    %v12 = vld [vmem:[%s0] sm:$0xff]
    %v13 = vld [vmem:[%s1] sm:$0xff]
    %15 = vset.pattern.permute.xlu0 0
    %16 = vperm.xlu0 %15, %v13
    %v17 = vpop.permute.xlu0 %16
    %v19 = vadd.f32 %v12, %v17
    %vm20 = vcmask 130048
    %21 = vst.msk [vmem:[#allocation2] sm:$0xff] %vm20, %v19
    // Predicated region
    $region10: #{tpu_custom_call.1} parent=1 // pred_check
      _
    $region11: #{tpu_custom_call.1} parent=1 // pred_check_branch
      %23 = sbr.rel (0) target = $region13
    $region12: #{tpu_custom_call.1} parent=1 // pred_region
      %s25 = ssub.s32 128, 128
      %26 = vsyncadd [#allocation3], %s25
      %s28 = sshll.u32 [#allocation2], 4
      %s29 = int_to_ptr.vmem [resolvable:$true] %s28
      %31 = dma.vmem_to_hbm [thread:$0]  %s29, 128, %s2, [#allocation3]
    $region13: #{tpu_custom_call.1} parent=1 // pred_fallthru
      _
    // Predicated region
    $region14: #{tpu_custom_call.1} parent=1 // pred_check
      _
    $region15: #{tpu_custom_call.1} parent=1 // pred_check_branch
      %33 = sbr.rel (0) target = $region17
    $region16: #{tpu_custom_call.1} parent=1 // pred_region
      %34 = dma.done [#allocation3], 128
    $region17: #{tpu_custom_call.1} parent=1 // pred_fallthru
      _
    %35 = vsyncpa [#allocation3], 1

</llo_original>
